<compile_context>
chip_gen: v5e
topology: v5e:2x2
jax: 0.10.0
libtpu: 0.0.40
codegen_flags: <defaults>
</compile_context>

<pallas_src>
import jax
import jax.numpy as jnp
import numpy as np
from jax.experimental import pallas as pl
from jax.experimental.pallas import tpu as pltpu

_LANE = 128      # vreg lane width
_SUBLANE = 8     # f32 sublanes per vreg
_MAX_TILE_ROWS = 1024   # 1024 x 128 x 4B = 512 KiB per buffer


def _identity_kernel(x_ref, o_ref):
    # Pure copy: full-tile vector loads and unmasked lane-dense stores.
    o_ref[...] = x_ref[...]


def our_identity_forward(x, *args, **kwargs):
    """Pallas equivalent of our_Identity.forward: returns x unchanged."""
    orig_shape = x.shape
    orig_dtype = x.dtype
    total = int(np.prod(orig_shape)) if orig_shape else 1

    # Flatten and pad so the data forms a (rows, 128) slab with rows % 8 == 0
    # (satisfies the (8, 128) block constraint and keeps stores unmasked).
    flat = x.reshape(-1)
    chunk = _LANE * _SUBLANE
    padded_total = ((total + chunk - 1) // chunk) * chunk
    if padded_total != total:
        flat = jnp.pad(flat, (0, padded_total - total))
    rows = padded_total // _LANE

    # Row tiling: one block for small inputs, <=1024-row blocks for large ones
    # (grid axis marked "parallel" so v7x's two TensorCores can split it).
    tile_rows = min(rows, _MAX_TILE_ROWS)
    if rows % tile_rows != 0:
        new_rows = ((rows + tile_rows - 1) // tile_rows) * tile_rows
        flat = jnp.pad(flat, (0, (new_rows - rows) * _LANE))
        rows = new_rows
    x2d = flat.reshape(rows, _LANE)

    out2d = pl.pallas_call(
        _identity_kernel,
        out_shape=jax.ShapeDtypeStruct((rows, _LANE), orig_dtype),
        grid=(rows // tile_rows,),
        in_specs=[pl.BlockSpec((tile_rows, _LANE), lambda i: (i, 0))],
        out_specs=pl.BlockSpec((tile_rows, _LANE), lambda i: (i, 0)),
        compiler_params=pltpu.CompilerParams(
            dimension_semantics=("parallel",)),
    )(x2d)

    return out2d.reshape(-1)[:total].reshape(orig_shape)


if __name__ == "__main__":
    # Small deterministic input consistent with the module's forward (any
    # tensor shape works; we use an NCHW-style (2, 4, 16, 16) float32 tensor).
    key = jax.random.PRNGKey(0)
    x = jax.random.normal(key, (2, 4, 16, 16), jnp.float32)

    out = jax.block_until_ready(our_identity_forward(x))

    assert out.shape == x.shape
    assert out.dtype == x.dtype
    np.testing.assert_allclose(np.asarray(out), np.asarray(x), rtol=0.0, atol=0.0)

    # Also exercise a shape that needs padding (not a multiple of 8*128).
    x2 = jax.random.normal(jax.random.PRNGKey(0), (3, 5, 7), jnp.float32)
    out2 = jax.block_until_ready(our_identity_forward(x2, "extra_arg", flag=True))
    np.testing.assert_allclose(np.asarray(out2), np.asarray(x2), rtol=0.0, atol=0.0)

    print("KERNEL_OK")
</pallas_src>

<mosaic_0001>
module attributes {stable_mosaic.version = 11 : i64} {
  func.func @_identity_kernel(%arg0: i32, %arg1: memref<16x128xf32, #tpu.memory_space<vmem>>, %arg2: memref<16x128xf32, #tpu.memory_space<vmem>>) attributes {dimension_semantics = [#tpu.dimension_semantics<parallel>], iteration_bounds = array<i64: 1>, scalar_prefetch = 0 : i64, scratch_operands = 0 : i64, tpu.core_type = #tpu.core_type<tc>, window_params = [{transform_indices = @transform_0, window_bounds = array<i64: 16, 128>}, {transform_indices = @transform_1, window_bounds = array<i64: 16, 128>}]} {
    %c0 = arith.constant 0 : index
    %c0_0 = arith.constant 0 : index
    %0 = vector.load %arg1[%c0, %c0_0] : memref<16x128xf32, #tpu.memory_space<vmem>>, vector<16x128xf32>
    %c0_1 = arith.constant 0 : index
    %c0_2 = arith.constant 0 : index
    %1 = vector.load %arg2[%c0_1, %c0_2] : memref<16x128xf32, #tpu.memory_space<vmem>>, vector<16x128xf32>
    tpu.vector_store %arg2[%c0_1, %c0_2], %0 {strides = array<i32>} : memref<16x128xf32, #tpu.memory_space<vmem>>, vector<16x128xf32>,
    return
  }
  func.func @transform_0(%arg0: i32) -> (i32, i32) {
    %c0_i32 = arith.constant 0 : i32
    %c0_i32_0 = arith.constant 0 : i32
    return %arg0, %c0_i32 : i32, i32
  }
  func.func @transform_1(%arg0: i32) -> (i32, i32) {
    %c0_i32 = arith.constant 0 : i32
    %c0_i32_0 = arith.constant 0 : i32
    return %arg0, %c0_i32 : i32, i32
  }
}

</mosaic_0001>

<llo_original>
// kernel: tpu_custom_call.1
$region0: #{tpu_custom_call.1}
  #allocation0 [shape = 'u32[]', space=smem, size = 0x4, offset = 0x4, fixed_abs, tag = 'smem constant byte address 0x4 - core index']
  #allocation1 [shape = 'u32[72,128]{1,0:T(1,128)}', space=vmem, size = 0x9000, scoped, tag = 'internal scratch']
  %s0 = inlined_call_operand.hbm [shape: f32[16,128], index: 0, kind: input, shape index: {}]
  %s1 = inlined_call_operand.hbm [shape: f32[16,128], index: 1, kind: output, shape index: {}]
  %s2 = sld [smem:[#allocation0]]
  $region18: #{tpu_custom_call.1} parent=0
    _
  %s4 = ssub.s32 1, %s2
  %s5 = scalar_select 0, %s4, %s2
  $region1: #{tpu_custom_call.1} parent=0
    #allocation2 [shape = 'u8[8192]{0}', space=vmem, size = 0x2000, scoped, tag = 'input window, operand 0, single buffered']
    #allocation3 [shape = 's32[1]{0}', space=sflag, size = 0x4, scoped, tag = 'scoped memory for tpu_custom_call.1']
    #allocation4 [shape = 's32[1]{0}', space=sflag, size = 0x4, scoped, tag = 'scoped memory for tpu_custom_call.1']
    #allocation5 [shape = 'u8[8192]{0}', space=vmem, size = 0x2000, scoped, tag = 'output window, operand 0, single buffered']
    %6 = vsyncpa [#allocation3], 0
    %7 = vsyncpa [#allocation4], 0
    // Predicated region
    $region2: #{tpu_custom_call.1} parent=1 // pred_check
      _
    $region3: #{tpu_custom_call.1} parent=1 // pred_check_branch
      %9 = sbr.rel (0) target = $region5
    $region4: #{tpu_custom_call.1} parent=1 // pred_region
      %11 = vsyncadd [#allocation3], 0
      %s12 = sshll.u32 %s0, 4
      %s13 = int_to_ptr.hbm [resolvable:$true] %s12
      %s14 = sshll.u32 [#allocation2], 4
      %s15 = int_to_ptr.vmem [resolvable:$true] %s14
      %20 = dma.hbm_to_vmem [thread:$0]  %s13, 256, %s15, [#allocation3], 128, 128, 8
    $region5: #{tpu_custom_call.1} parent=1 // pred_fallthru
      _
    // Predicated region
    $region6: #{tpu_custom_call.1} parent=1 // pred_check
      _
    $region7: #{tpu_custom_call.1} parent=1 // pred_check_branch
      %22 = sbr.rel (0) target = $region9
    $region8: #{tpu_custom_call.1} parent=1 // pred_region
      %24 = dma.done [#allocation3], 256
    $region9: #{tpu_custom_call.1} parent=1 // pred_fallthru
      _
    %v25 = vld [vmem:[#allocation2] sm:$0xff]
    %v26 = vld [vmem:[#allocation2 + $0x8] sm:$0xff]
    %27 = vst [vmem:[#allocation5] sm:$0xff] %v25
    %28 = vst [vmem:[#allocation5 + $0x8] sm:$0xff] %v26
    // Predicated region
    $region10: #{tpu_custom_call.1} parent=1 // pred_check
      _
    $region11: #{tpu_custom_call.1} parent=1 // pred_check_branch
      %30 = sbr.rel (0) target = $region13
    $region12: #{tpu_custom_call.1} parent=1 // pred_region
      %32 = vsyncadd [#allocation4], 0
      %s33 = sshll.u32 [#allocation5], 4
      %s34 = int_to_ptr.vmem [resolvable:$true] %s33
      %s35 = sshll.u32 %s1, 4
      %s36 = int_to_ptr.hbm [resolvable:$true] %s35
      %41 = dma.vmem_to_hbm [thread:$0]  %s34, 256, %s36, [#allocation4], 128, 128, 8
    $region13: #{tpu_custom_call.1} parent=1 // pred_fallthru
      _
    // Predicated region
    $region14: #{tpu_custom_call.1} parent=1 // pred_check
      _
    $region15: #{tpu_custom_call.1} parent=1 // pred_check_branch
      %43 = sbr.rel (0) target = $region17
    $region16: #{tpu_custom_call.1} parent=1 // pred_region
      %45 = dma.done [#allocation4], 256
    $region17: #{tpu_custom_call.1} parent=1 // pred_fallthru
      _
    %46 = vsyncpa [#allocation3], 1
    %47 = vsyncpa [#allocation4], 1

</llo_original>
